<compile_context>
chip_gen: v5e
topology: v5e:2x2
jax: 0.10.0
libtpu: 0.0.40
codegen_flags: <defaults>
</compile_context>

<pallas_src>
import jax
import jax.numpy as jnp
from jax.experimental import pallas as pl
from jax.experimental.pallas import tpu as pltpu


def logreg_kernel(x_ref, w_ref, b_ref, o_ref):
    # MXU matmul (f32 accumulation regardless of operand dtype), f32 bias add,
    # numerically-stable softmax on VPU/EUP.
    logits = jnp.dot(x_ref[...], w_ref[...],
                     preferred_element_type=jnp.float32) + b_ref[...]
    m = jnp.max(logits, axis=-1, keepdims=True)
    e = jnp.exp(logits - m)
    denom = jnp.sum(e, axis=-1, keepdims=True)
    probs = e / denom                       # exact normalisation: rows sum to 1.0
    o_ref[...] = probs.astype(o_ref.dtype)


def logistic_regression(x, w, b, *, block_b=512, dot_dtype=None):
    """x: [B, D_in], w: [D_in, D_out], b: [1 or (), D_out] -> softmax(x @ w + b), [B, D_out].

    block_b:  max batch-tile rows per grid step (sized well under v7x's 64 MiB VMEM).
    dot_dtype: optional dtype (e.g. jnp.bfloat16) for the matmul operands on v6e/v7x.
    """
    B, D_in = x.shape
    D_out = w.shape[-1]
    out_dtype = x.dtype

    LANE = 128
    SUBLANE = 8

    # --- Lane-dense output: pad D_out up to a multiple of 128. ---------------------
    d_pad = ((D_out + LANE - 1) // LANE) * LANE
    if d_pad != D_out:
        # Zero weight columns + (-inf) bias columns => padded logits are -inf,
        # exp(-inf - m) == 0, so the padded columns contribute nothing to softmax.
        w = jnp.pad(w, ((0, 0), (0, d_pad - D_out)))
        b = jnp.pad(b.reshape(1, D_out), ((0, 0), (0, d_pad - D_out)),
                    constant_values=-jnp.inf)
    b = b.reshape(1, d_pad).astype(jnp.float32)   # bias/softmax math stays f32

    # --- Batch tiling: sublane-aligned tile, pad ragged batch. ----------------------
    tb = min(block_b, ((B + SUBLANE - 1) // SUBLANE) * SUBLANE)
    b_pad = ((B + tb - 1) // tb) * tb
    if b_pad != B:
        x = jnp.pad(x, ((0, b_pad - B), (0, 0)))

    # --- Optional low-precision MXU operands (v6e/v7x); accumulation stays f32. -----
    if dot_dtype is not None:
        x = x.astype(dot_dtype)
        w = w.astype(dot_dtype)

    grid = (b_pad // tb,)

    cost = pl.CostEstimate(
        flops=2 * b_pad * D_in * d_pad + 4 * b_pad * d_pad,
        transcendentals=b_pad * d_pad,                      # exp
        bytes_accessed=(x.size * x.dtype.itemsize
                        + w.size * w.dtype.itemsize
                        + b.size * 4
                        + b_pad * d_pad * jnp.dtype(out_dtype).itemsize),
    )

    out = pl.pallas_call(
        logreg_kernel,
        out_shape=jax.ShapeDtypeStruct((b_pad, d_pad), out_dtype),
        grid=grid,
        in_specs=[
            pl.BlockSpec((tb, D_in), lambda i: (i, 0)),      # streamed per batch tile
            pl.BlockSpec((D_in, d_pad), lambda i: (0, 0)),   # VMEM-resident weights
            pl.BlockSpec((1, d_pad), lambda i: (0, 0)),      # VMEM-resident bias
        ],
        out_specs=pl.BlockSpec((tb, d_pad), lambda i: (i, 0)),
        compiler_params=pltpu.CompilerParams(
            # Independent batch tiles -> megacore sharding on v7x.
            dimension_semantics=("parallel",),
        ),
        cost_estimate=cost,
    )(x, w, b)

    # Strip batch padding and the lane padding of the class dimension.
    return out[:B, :D_out]


if __name__ == "__main__":
    # Small shapes consistent with the module: batch=8, input_dim=32, output_dim=16.
    B, D_in, D_out = 8, 32, 16

    key = jax.random.PRNGKey(0)
    kx, kw, kb = jax.random.split(key, 3)

    # Deterministic init mimicking torch.nn.Linear: U(-1/sqrt(in), 1/sqrt(in)).
    # PyTorch stores weight as [out, in]; we keep it as [in, out] for the kernel.
    bound = 1.0 / (D_in ** 0.5)
    w = jax.random.uniform(kw, (D_in, D_out), jnp.float32, -bound, bound)
    b = jax.random.uniform(kb, (1, D_out), jnp.float32, -bound, bound)
    x = jax.random.normal(kx, (B, D_in), jnp.float32)

    out = logistic_regression(x, w, b)
    out = jax.block_until_ready(out)

    # Sanity check against a plain JAX reference.
    ref = jax.nn.softmax(x @ w + b, axis=-1)
    assert out.shape == (B, D_out)
    assert jnp.allclose(out, ref, atol=1e-3, rtol=1e-3)
    assert jnp.allclose(jnp.sum(out, axis=-1), 1.0, atol=1e-3)

    print("KERNEL_OK")
</pallas_src>

<mosaic_0001>
module attributes {stable_mosaic.version = 11 : i64} {
  func.func @logreg_kernel(%arg0: i32, %arg1: memref<8x32xf32, #tpu.memory_space<vmem>>, %arg2: memref<32x128xf32, #tpu.memory_space<vmem>>, %arg3: memref<1x128xf32, #tpu.memory_space<vmem>>, %arg4: memref<8x128xf32, #tpu.memory_space<vmem>>) attributes {dimension_semantics = [#tpu.dimension_semantics<parallel>], iteration_bounds = array<i64: 1>, scalar_prefetch = 0 : i64, scratch_operands = 0 : i64, tpu.core_type = #tpu.core_type<tc>, window_params = [{transform_indices = @transform_0, window_bounds = array<i64: 8, 32>}, {pipeline_mode = #tpu.pipeline_mode<synchronous>, transform_indices = @transform_1, window_bounds = array<i64: 32, 128>}, {pipeline_mode = #tpu.pipeline_mode<synchronous>, transform_indices = @transform_2, window_bounds = array<i64: 1, 128>}, {transform_indices = @transform_3, window_bounds = array<i64: 8, 128>}]} {
    %c0 = arith.constant 0 : index
    %c0_0 = arith.constant 0 : index
    %0 = vector.load %arg1[%c0, %c0_0] : memref<8x32xf32, #tpu.memory_space<vmem>>, vector<8x32xf32>
    %c0_1 = arith.constant 0 : index
    %c0_2 = arith.constant 0 : index
    %1 = vector.load %arg2[%c0_1, %c0_2] : memref<32x128xf32, #tpu.memory_space<vmem>>, vector<32x128xf32>
    %cst = arith.constant dense<0.000000e+00> : vector<8x128xf32>
    %2 = tpu.matmul %0, %1, %cst {dimension_numbers = #tpu.dot_dimension_numbers<[1], [0], [0], [1], [0, 0, 1, 1], [], []>} : vector<8x32xf32>, vector<32x128xf32>, vector<8x128xf32> -> vector<8x128xf32>
    %c0_3 = arith.constant 0 : index
    %c0_4 = arith.constant 0 : index
    %3 = vector.load %arg3[%c0_3, %c0_4] : memref<1x128xf32, #tpu.memory_space<vmem>>, vector<1x128xf32>
    %4 = vector.broadcast %3 : vector<1x128xf32> to vector<8x128xf32>
    %5 = arith.addf %2, %4 : vector<8x128xf32>
    %cst_5 = arith.constant dense<0xFF800000> : vector<8xf32>
    %6 = vector.multi_reduction <maximumf>, %5, %cst_5 [1] : vector<8x128xf32> to vector<8xf32>
    %7 = vector.shape_cast %6 : vector<8xf32> to vector<8x1xf32>
    %8 = vector.broadcast %7 : vector<8x1xf32> to vector<8x128xf32>
    %9 = arith.subf %5, %8 : vector<8x128xf32>
    %10 = math.exp %9 : vector<8x128xf32>
    %cst_6 = arith.constant dense<0.000000e+00> : vector<8xf32>
    %11 = vector.multi_reduction <add>, %10, %cst_6 [1] : vector<8x128xf32> to vector<8xf32>
    %12 = vector.shape_cast %11 : vector<8xf32> to vector<8x1xf32>
    %13 = vector.broadcast %12 : vector<8x1xf32> to vector<8x128xf32>
    %14 = arith.divf %10, %13 : vector<8x128xf32>
    %c0_7 = arith.constant 0 : index
    %c0_8 = arith.constant 0 : index
    %15 = vector.load %arg4[%c0_7, %c0_8] : memref<8x128xf32, #tpu.memory_space<vmem>>, vector<8x128xf32>
    tpu.vector_store %arg4[%c0_7, %c0_8], %14 {strides = array<i32>} : memref<8x128xf32, #tpu.memory_space<vmem>>, vector<8x128xf32>,
    return
  }
  func.func @transform_0(%arg0: i32) -> (i32, i32) {
    %c0_i32 = arith.constant 0 : i32
    %c0_i32_0 = arith.constant 0 : i32
    return %arg0, %c0_i32 : i32, i32
  }
  func.func @transform_1(%arg0: i32) -> (i32, i32) {
    %c0_i32 = arith.constant 0 : i32
    %c0_i32_0 = arith.constant 0 : i32
    %c0_i32_1 = arith.constant 0 : i32
    return %c0_i32, %c0_i32_0 : i32, i32
  }
  func.func @transform_2(%arg0: i32) -> (i32, i32) {
    %c0_i32 = arith.constant 0 : i32
    %c0_i32_0 = arith.constant 0 : i32
    %c0_i32_1 = arith.constant 0 : i32
    return %c0_i32, %c0_i32_0 : i32, i32
  }
  func.func @transform_3(%arg0: i32) -> (i32, i32) {
    %c0_i32 = arith.constant 0 : i32
    %c0_i32_0 = arith.constant 0 : i32
    return %arg0, %c0_i32 : i32, i32
  }
}

</mosaic_0001>

<llo_original>
// kernel: tpu_custom_call.1
$region0: #{tpu_custom_call.1}
  #allocation0 [shape = 'u32[]', space=smem, size = 0x4, offset = 0x4, fixed_abs, tag = 'smem constant byte address 0x4 - core index']
  #allocation1 [shape = 'u32[72,128]{1,0:T(1,128)}', space=vmem, size = 0x9000, scoped, tag = 'internal scratch']
  %s0 = inlined_call_operand.hbm [shape: f32[8,32], index: 0, kind: input, shape index: {}]
  %s1 = inlined_call_operand.hbm [shape: f32[32,128], index: 1, kind: input, shape index: {}]
  %s2 = inlined_call_operand.vmem [shape: f32[1,128], index: 2, kind: input, shape index: {}]
  %s3 = inlined_call_operand.hbm [shape: f32[8,128], index: 3, kind: output, shape index: {}]
  %s4 = sld [smem:[#allocation0]]
  $region30: #{tpu_custom_call.1} parent=0
    _
  %s6 = ssub.s32 1, %s4
  %s7 = scalar_select 0, %s6, %s4
  $region1: #{tpu_custom_call.1} parent=0
    #allocation2 [shape = 'u8[4096]{0}', space=vmem, size = 0x1000, scoped, tag = 'input window, operand 0, single buffered']
    #allocation3 [shape = 's32[1]{0}', space=sflag, size = 0x4, scoped, tag = 'scoped memory for tpu_custom_call.1']
    #allocation4 [shape = 's32[1]{0}', space=sflag, size = 0x4, scoped, tag = 'scoped memory for tpu_custom_call.1']
    #allocation5 [shape = 'u8[16384]{0}', space=vmem, size = 0x4000, scoped, tag = 'input window, operand 1, single buffered']
    #allocation6 [shape = 's32[1]{0}', space=sflag, size = 0x4, scoped, tag = 'scoped memory for tpu_custom_call.1']
    #allocation7 [shape = 'u8[4096]{0}', space=vmem, size = 0x1000, scoped, tag = 'output window, operand 0, single buffered']
    %8 = vsyncpa [#allocation3], 0
    %9 = vsyncpa [#allocation6], 0
    %10 = vsyncpa [#allocation4], 0
    // Predicated region
    $region2: #{tpu_custom_call.1} parent=1 // pred_check
      _
    $region3: #{tpu_custom_call.1} parent=1 // pred_check_branch
      %12 = sbr.rel (0) target = $region5
    $region4: #{tpu_custom_call.1} parent=1 // pred_region
      %14 = vsyncadd [#allocation3], 0
      %s16 = sshll.u32 %s0, 4
      %s17 = int_to_ptr.hbm [resolvable:$true] %s16
      %s18 = sshll.u32 [#allocation2], 4
      %s19 = int_to_ptr.vmem [resolvable:$true] %s18
      %21 = dma.hbm_to_vmem [thread:$0]  %s17, 128, %s19, [#allocation3]
    $region5: #{tpu_custom_call.1} parent=1 // pred_fallthru
      _
    // Predicated region
    $region6: #{tpu_custom_call.1} parent=1 // pred_check
      _
    $region7: #{tpu_custom_call.1} parent=1 // pred_check_branch
      %23 = sbr.rel (0) target = $region9
    $region8: #{tpu_custom_call.1} parent=1 // pred_region
      %25 = vsyncadd [#allocation6], 0
      %s26 = sshll.u32 %s1, 4
      %s27 = int_to_ptr.hbm [resolvable:$true] %s26
      %s28 = sshll.u32 [#allocation5], 4
      %s29 = int_to_ptr.vmem [resolvable:$true] %s28
      %34 = dma.hbm_to_vmem [thread:$0]  %s27, 512, %s29, [#allocation6], 128, 128, 8
    $region9: #{tpu_custom_call.1} parent=1 // pred_fallthru
      _
    // Predicated region
    $region10: #{tpu_custom_call.1} parent=1 // pred_check
      _
    $region11: #{tpu_custom_call.1} parent=1 // pred_check_branch
      %36 = sbr.rel (0) target = $region13
    $region12: #{tpu_custom_call.1} parent=1 // pred_region
      _
    $region13: #{tpu_custom_call.1} parent=1 // pred_fallthru
      _
    // Predicated region
    $region14: #{tpu_custom_call.1} parent=1 // pred_check
      _
    $region15: #{tpu_custom_call.1} parent=1 // pred_check_branch
      %38 = sbr.rel (0) target = $region17
    $region16: #{tpu_custom_call.1} parent=1 // pred_region
      %40 = dma.done [#allocation3], 128
    $region17: #{tpu_custom_call.1} parent=1 // pred_fallthru
      _
    // Predicated region
    $region18: #{tpu_custom_call.1} parent=1 // pred_check
      _
    $region19: #{tpu_custom_call.1} parent=1 // pred_check_branch
      %42 = sbr.rel (0) target = $region21
    $region20: #{tpu_custom_call.1} parent=1 // pred_region
      %44 = dma.done [#allocation6], 512
    $region21: #{tpu_custom_call.1} parent=1 // pred_fallthru
      _
    %v45 = vld [vmem:[#allocation2] sm:$0xff]
    %v46 = vld [vmem:[#allocation5] sm:$0xff]
    %v47 = vld [vmem:[#allocation5 + $0x8] sm:$0xff]
    %v48 = vld [vmem:[#allocation5 + $0x10] sm:$0xff]
    %v49 = vld [vmem:[#allocation5 + $0x18] sm:$0xff]
    %v50 = vld [vmem:[%s2] sm:$0x1]
    %v52 = vperm.slane %v50, 0
    %vm54 = vcmask 261120
    %v56 = vsel %vm54, %v45, 0
    %58 = vmatpush.msra.mxu0 0.0
    %59 = vmatpush.msra.mxu0 0.0
    %60 = vmatpush.msra.mxu0 0.0
    %61 = vmatpush.msra.mxu0 0.0
    %62 = vmatpush.msra.mxu0 0.0
    %63 = vmatpush.msra.mxu0 0.0
    %64 = vmatpush.msra.mxu0 0.0
    %65 = vmatpush.msra.mxu0 0.0
    %66 = vmatpush.msra.mxu0 0.0
    %67 = vmatpush.msra.mxu0 0.0
    %68 = vmatpush.msra.mxu0 0.0
    %69 = vmatpush.msra.mxu0 0.0
    %70 = vmatpush.msra.mxu0 %v49
    %71 = vmatpush.msra.mxu0 %v48
    %72 = vmatpush.msra.mxu0 %v47
    %73 = vmatpush.msra.mxu0 %v46
    %74 = vmatmul.f32.gmra.mxu0 %v56
    %v75 = vpop.f32.mrf.mxu0
    %v76 = vadd.f32 %v52, %v75
    %77 = vdwg.mxu0
    %78 = vmax.xlane.f32.xlu0 %v76
    %v79 = vpop.xlane.xlu0 %78
    %v80 = vsub.f32 %v76, %v79
    %v81 = vmul.f32 %v80, 1.442695
    %v82 = vpow.pop %v81
    %83 = vadd.xlane.f32.xlu0 %v82
    %v84 = vpop.xlane.xlu0 %83
    %v85 = vrcp.pop %v84
    %v86 = vmul.f32 %v84, %v85
    %v87 = vsub.f32 1.0, %v86
    %v88 = vmul.f32 %v85, %v87
    %v89 = vadd.f32 %v85, %v88
    %vm90 = vweird.f32 %v84
    %vm91 = vweird.f32 %v85
    %vm92 = vmor %vm90, %vm91
    %v93 = vsel %vm92, %v85, %v89
    %v94 = vand.u32 2147483647, %v84
    %vm95 = vcmp.eq.f32.partialorder %v94, 8.507059e+37
    %v96 = vand.u32 %v84, 2147483648
    %v97 = vor.u32 1.1754944e-38, %v96
    %v98 = vsel %vm95, %v97, %v93
    %v99 = vmul.f32 %v82, %v98
    %100 = vst [vmem:[#allocation7] sm:$0xff] %v99
    // Predicated region
    $region22: #{tpu_custom_call.1} parent=1 // pred_check
      _
    $region23: #{tpu_custom_call.1} parent=1 // pred_check_branch
      %102 = sbr.rel (0) target = $region25
    $region24: #{tpu_custom_call.1} parent=1 // pred_region
      %104 = vsyncadd [#allocation4], 0
      %s106 = sshll.u32 [#allocation7], 4
      %s107 = int_to_ptr.vmem [resolvable:$true] %s106
      %s108 = sshll.u32 %s3, 4
      %s109 = int_to_ptr.hbm [resolvable:$true] %s108
      %111 = dma.vmem_to_hbm [thread:$0]  %s107, 128, %s109, [#allocation4]
    $region25: #{tpu_custom_call.1} parent=1 // pred_fallthru
      _
    // Predicated region
    $region26: #{tpu_custom_call.1} parent=1 // pred_check
      _
    $region27: #{tpu_custom_call.1} parent=1 // pred_check_branch
      %113 = sbr.rel (0) target = $region29
    $region28: #{tpu_custom_call.1} parent=1 // pred_region
      %115 = dma.done [#allocation4], 128
    $region29: #{tpu_custom_call.1} parent=1 // pred_fallthru
      _
    %116 = vsyncpa [#allocation3], 1
    %117 = vsyncpa [#allocation6], 1
    %118 = vsyncpa [#allocation4], 1

</llo_original>
